<compile_context>
chip_gen: v7x
topology: tpu7x:2x2x1
jax: 0.10.0
libtpu: 0.0.40
codegen_flags: <defaults>
</compile_context>

<pallas_src>
import functools

import jax
import jax.numpy as jnp
from jax.experimental import pallas as pl
from jax.experimental.pallas import tpu as pltpu

EPSILON = 0.2          # default from CLIPloss.__init__
LANES = 128            # vreg lane width
SUBLANES = 8           # vreg sublane count (f32)
MAX_BLOCK_ROWS = 2048  # 1 MiB/input/block; 6 MiB VMEM double-buffered
NUM_CORES = 2          # leading "parallel" axis (both TCs on v7x)


def _round_up(x, m):
    return ((x + m - 1) // m) * m


def _clip_loss_kernel(po_ref, p_ref, a_ref, out_ref, acc_ref, *,
                      eps, n, block_rows, blocks_per_core, need_mask):
    i = pl.program_id(1)

    @pl.when(i == 0)
    def _():
        acc_ref[...] = jnp.zeros_like(acc_ref)

    # Cast on the loaded vregs (supports bf16/f16 inputs with no extra HBM
    # pass in the wrapper); no-op for f32.  Pure VALU filler under the DMA.
    po = po_ref[...].astype(jnp.float32)
    p = p_ref[...].astype(jnp.float32)
    adv = a_ref[...].astype(jnp.float32)

    r = p / po
    clipped = jnp.clip(r, 1.0 - eps, 1.0 + eps)
    val = jnp.minimum(r * adv, clipped) * adv

    if need_mask:
        # Zero out padded / ragged-last-block / clamped-duplicate lanes using
        # the *intended* (unclamped) global element index.  Cheap VALU work
        # hidden under the DMA; only compiled in when coverage != N.
        c = pl.program_id(0)
        start = (c * blocks_per_core + i) * block_rows * LANES
        row_id = jax.lax.broadcasted_iota(jnp.int32, val.shape, 0)
        lane_id = jax.lax.broadcasted_iota(jnp.int32, val.shape, 1)
        elem = start + row_id * LANES + lane_id
        val = jnp.where(elem < n, val, 0.0)

    # Fold the (block_rows, 128) tile into the (8, 128) accumulator: the
    # reshape splits sublane groups (no layout change) and the axis-0 sum is a
    # chain of VALU adds -- no XLU work and no SMEM round trip per step.
    acc_ref[...] += val.reshape(-1, SUBLANES, LANES).sum(axis=0)

    @pl.when(i == pl.num_programs(1) - 1)
    def _():
        # Single cross-lane/sublane reduction + scalar SMEM store, per core.
        out_ref[0, 0] = jnp.sum(acc_ref[...])


def clip_loss(prob_old, prob, advantage, epsilon=EPSILON,
              block_rows_max=MAX_BLOCK_ROWS):
    """Pallas implementation of CLIPloss.forward.

    prob_old, prob, advantage: 1-D arrays of identical length N (any N, any
    float dtype; prob_old must be nonzero as in the reference module).
    Returns a scalar f32.
    """
    n = prob_old.shape[0]
    assert prob.shape == (n,) and advantage.shape == (n,)

    # Minimal padding only: to the 8x128 = 1024-element vreg boundary when N
    # is unaligned (no whole-block padding, no wrapper-side astype pass).
    # Padded lanes are zeroed by the in-kernel mask, so plain zero-padding is
    # fine (any 0/0 NaNs are discarded by jnp.where before accumulation).
    n_pad = _round_up(n, SUBLANES * LANES)
    if n_pad != n:
        pad = n_pad - n
        po = jnp.pad(prob_old, (0, pad))
        p = jnp.pad(prob, (0, pad))
        a = jnp.pad(advantage, (0, pad))
    else:
        po, p, a = prob_old, prob, advantage

    rows = n_pad // LANES                                   # multiple of 8
    block_rows = min(_round_up(block_rows_max, SUBLANES), rows)
    blocks_total = pl.cdiv(rows, block_rows)
    num_cores = NUM_CORES if blocks_total >= NUM_CORES else 1
    blocks_per_core = pl.cdiv(blocks_total, num_cores)
    covered = num_cores * blocks_per_core * block_rows * LANES
    need_mask = covered != n       # any pad / ragged block / duplicate block

    shape2d = (rows, LANES)
    po = po.reshape(shape2d)
    p = p.reshape(shape2d)
    a = a.reshape(shape2d)

    max_block = blocks_total - 1

    def in_map(c, i):
        # Clamp so a possibly-over-assigned last block on core 1 re-reads a
        # valid block; its contribution is zeroed by the in-kernel mask.
        return (jnp.minimum(c * blocks_per_core + i, max_block), 0)

    tile_spec = pl.BlockSpec((block_rows, LANES), in_map)

    bytes_accessed = (n_pad * (po.dtype.itemsize + p.dtype.itemsize
                               + a.dtype.itemsize) + 4 * num_cores)
    cost = pl.CostEstimate(flops=5 * n, transcendentals=0,
                           bytes_accessed=bytes_accessed)

    out = pl.pallas_call(
        functools.partial(
            _clip_loss_kernel,
            eps=float(epsilon),
            n=n,
            block_rows=block_rows,
            blocks_per_core=blocks_per_core,
            need_mask=need_mask,
        ),
        out_shape=jax.ShapeDtypeStruct((num_cores, 1), jnp.float32),
        grid_spec=pltpu.PrefetchScalarGridSpec(
            num_scalar_prefetch=0,
            grid=(num_cores, blocks_per_core),
            in_specs=[tile_spec, tile_spec, tile_spec],
            out_specs=pl.BlockSpec(
                (1, 1), lambda c, i: (c, 0), memory_space=pltpu.SMEM
            ),
            scratch_shapes=[pltpu.VMEM((SUBLANES, LANES), jnp.float32)],
        ),
        compiler_params=pltpu.CompilerParams(
            # Core axis shards across TCs on v7x; block axis is the reduction.
            dimension_semantics=("parallel", "arbitrary"),
        ),
        cost_estimate=cost,
    )(po, p, a)
    # Sum the per-core partials (tiny host-side op).
    return jnp.sum(out)


def clip_loss_ref(prob_old, prob, advantage, epsilon=EPSILON):
    po = prob_old.astype(jnp.float32)
    p = prob.astype(jnp.float32)
    a = advantage.astype(jnp.float32)
    r = p / po
    return jnp.sum(
        jnp.minimum(r * a, jnp.clip(r, 1.0 - epsilon, 1.0 + epsilon)) * a
    )


if __name__ == "__main__":
    key = jax.random.PRNGKey(0)
    k1, k2, k3 = jax.random.split(key, 3)

    N = 2048  # number of actions in the batch
    # Probabilities are strictly positive.
    prob_old = jax.random.uniform(k1, (N,), jnp.float32, minval=0.1, maxval=1.0)
    prob = jax.random.uniform(k2, (N,), jnp.float32, minval=0.1, maxval=1.0)
    advantage = jax.random.normal(k3, (N,), jnp.float32)

    loss = jax.block_until_ready(clip_loss(prob_old, prob, advantage, 0.2))
    ref = jax.block_until_ready(clip_loss_ref(prob_old, prob, advantage, 0.2))
    assert jnp.allclose(loss, ref, rtol=1e-5, atol=1e-4), (loss, ref)

    # Multi-block + dual-core (parallel axis) accumulation path.
    loss_ms = jax.block_until_ready(
        clip_loss(prob_old, prob, advantage, 0.2, block_rows_max=8)
    )
    assert jnp.allclose(loss_ms, ref, rtol=1e-5, atol=1e-4), (loss_ms, ref)

    # Unaligned N exercises the minimal-pad + in-kernel tail mask path.
    N2 = 3000
    k4, k5, k6 = jax.random.split(jax.random.PRNGKey(1), 3)
    po2 = jax.random.uniform(k4, (N2,), jnp.float32, minval=0.1, maxval=1.0)
    p2 = jax.random.uniform(k5, (N2,), jnp.float32, minval=0.1, maxval=1.0)
    a2 = jax.random.normal(k6, (N2,), jnp.float32)
    loss2 = jax.block_until_ready(clip_loss(po2, p2, a2, 0.2))
    ref2 = jax.block_until_ready(clip_loss_ref(po2, p2, a2, 0.2))
    assert jnp.allclose(loss2, ref2, rtol=1e-5, atol=1e-3), (loss2, ref2)

    # Unaligned N + tiny blocks: ragged last block, clamped duplicate block on
    # core 1, and the dual-core split all at once.
    loss3 = jax.block_until_ready(clip_loss(po2, p2, a2, 0.2, block_rows_max=8))
    assert jnp.allclose(loss3, ref2, rtol=1e-5, atol=1e-3), (loss3, ref2)

    # bf16 inputs: cast happens in-kernel on the loaded vregs (no wrapper pass).
    loss_bf = jax.block_until_ready(
        clip_loss(prob_old.astype(jnp.bfloat16), prob.astype(jnp.bfloat16),
                  advantage.astype(jnp.bfloat16), 0.2)
    )
    ref_bf = jax.block_until_ready(
        clip_loss_ref(prob_old.astype(jnp.bfloat16), prob.astype(jnp.bfloat16),
                      advantage.astype(jnp.bfloat16), 0.2)
    )
    assert jnp.allclose(loss_bf, ref_bf, rtol=1e-3, atol=1e-2), (loss_bf, ref_bf)

    print("KERNEL_OK")
</pallas_src>

<mosaic_0001>
module attributes {stable_mosaic.version = 11 : i64} {
  func.func @_clip_loss_kernel(%arg0: i32, %arg1: i32, %arg2: memref<16x128xf32, #tpu.memory_space<vmem>>, %arg3: memref<16x128xf32, #tpu.memory_space<vmem>>, %arg4: memref<16x128xf32, #tpu.memory_space<vmem>>, %arg5: memref<1x1xf32, #tpu.memory_space<smem>>, %arg6: memref<8x128xf32, #tpu.memory_space<vmem>>) attributes {dimension_semantics = [#tpu.dimension_semantics<parallel>, #tpu.dimension_semantics<arbitrary>], iteration_bounds = array<i64: 1, 1>, scalar_prefetch = 0 : i64, scratch_operands = 1 : i64, tpu.core_type = #tpu.core_type<tc>, window_params = [{transform_indices = @transform_0, window_bounds = array<i64: 16, 128>}, {transform_indices = @transform_1, window_bounds = array<i64: 16, 128>}, {transform_indices = @transform_2, window_bounds = array<i64: 16, 128>}, {transform_indices = @transform_3, window_bounds = array<i64: 1, 1>}]} {
    %c0_i32 = arith.constant 0 : i32
    %0 = arith.cmpi eq, %arg1, %c0_i32 : i32
    %1 = arith.extui %0 : i1 to i32
    %c0_i32_0 = arith.constant 0 : i32
    %2 = arith.cmpi ne, %1, %c0_i32_0 : i32
    scf.if %2 {
      %cst_14 = arith.constant 0.000000e+00 : f32
      %22 = vector.broadcast %cst_14 : f32 to vector<8x128xf32>
      %c0_15 = arith.constant 0 : index
      %c0_16 = arith.constant 0 : index
      %23 = vector.load %arg6[%c0_15, %c0_16] : memref<8x128xf32, #tpu.memory_space<vmem>>, vector<8x128xf32>
      tpu.vector_store %arg6[%c0_15, %c0_16], %22 {strides = array<i32>} : memref<8x128xf32, #tpu.memory_space<vmem>>, vector<8x128xf32>,
    } else {
    }
    %c0 = arith.constant 0 : index
    %c0_1 = arith.constant 0 : index
    %3 = vector.load %arg2[%c0, %c0_1] : memref<16x128xf32, #tpu.memory_space<vmem>>, vector<16x128xf32>
    %c0_2 = arith.constant 0 : index
    %c0_3 = arith.constant 0 : index
    %4 = vector.load %arg3[%c0_2, %c0_3] : memref<16x128xf32, #tpu.memory_space<vmem>>, vector<16x128xf32>
    %c0_4 = arith.constant 0 : index
    %c0_5 = arith.constant 0 : index
    %5 = vector.load %arg4[%c0_4, %c0_5] : memref<16x128xf32, #tpu.memory_space<vmem>>, vector<16x128xf32>
    %6 = arith.divf %4, %3 : vector<16x128xf32>
    %cst = arith.constant 8.000000e-01 : f32
    %cst_6 = arith.constant 1.200000e+00 : f32
    %7 = vector.broadcast %cst : f32 to vector<16x128xf32>
    %8 = arith.maximumf %7, %6 : vector<16x128xf32>
    %9 = vector.broadcast %cst_6 : f32 to vector<16x128xf32>
    %10 = arith.minimumf %9, %8 : vector<16x128xf32>
    %11 = arith.mulf %6, %5 : vector<16x128xf32>
    %12 = arith.minimumf %11, %10 : vector<16x128xf32>
    %13 = arith.mulf %12, %5 : vector<16x128xf32>
    %c0_7 = arith.constant 0 : index
    %c0_8 = arith.constant 0 : index
    %14 = vector.load %arg6[%c0_7, %c0_8] : memref<8x128xf32, #tpu.memory_space<vmem>>, vector<8x128xf32>
    %15 = vector.shape_cast %13 : vector<16x128xf32> to vector<2x8x128xf32>
    %cst_9 = arith.constant dense<0.000000e+00> : vector<8x128xf32>
    %16 = vector.multi_reduction <add>, %15, %cst_9 [0] : vector<2x8x128xf32> to vector<8x128xf32>
    %17 = arith.addf %14, %16 : vector<8x128xf32>
    %c0_10 = arith.constant 0 : index
    %c0_11 = arith.constant 0 : index
    %18 = vector.load %arg6[%c0_10, %c0_11] : memref<8x128xf32, #tpu.memory_space<vmem>>, vector<8x128xf32>
    tpu.vector_store %arg6[%c0_10, %c0_11], %17 {strides = array<i32>} : memref<8x128xf32, #tpu.memory_space<vmem>>, vector<8x128xf32>,
    %c0_i32_12 = arith.constant 0 : i32
    %19 = arith.cmpi eq, %arg1, %c0_i32_12 : i32
    %20 = arith.extui %19 : i1 to i32
    %c0_i32_13 = arith.constant 0 : i32
    %21 = arith.cmpi ne, %20, %c0_i32_13 : i32
    scf.if %21 {
      %c0_14 = arith.constant 0 : index
      %c0_15 = arith.constant 0 : index
      %22 = vector.load %arg6[%c0_14, %c0_15] : memref<8x128xf32, #tpu.memory_space<vmem>>, vector<8x128xf32>
      %23 = vector.shape_cast %22 : vector<8x128xf32> to vector<1x8x128xf32>
      %cst_16 = arith.constant dense<0.000000e+00> : vector<1xf32>
      %24 = vector.multi_reduction <add>, %23, %cst_16 [1, 2] : vector<1x8x128xf32> to vector<1xf32>
      %25 = vector.shape_cast %24 : vector<1xf32> to vector<1x1x1xf32>
      %26 = vector.extract %25[0, 0, 0] : f32 from vector<1x1x1xf32>
      %c0_17 = arith.constant 0 : index
      %c0_18 = arith.constant 0 : index
      %27 = memref.load %arg5[%c0_17, %c0_18] : memref<1x1xf32, #tpu.memory_space<smem>>
      memref.store %26, %arg5[%c0_17, %c0_18] : memref<1x1xf32, #tpu.memory_space<smem>>
    } else {
    }
    return
  }
  func.func @transform_0(%arg0: i32, %arg1: i32) -> (i32, i32) {
    %c1_i32 = arith.constant 1 : i32
    %0 = arith.muli %arg0, %c1_i32 : i32
    %1 = arith.addi %0, %arg1 : i32
    %c0_i32 = arith.constant 0 : i32
    %2 = arith.minsi %1, %c0_i32 : i32
    %c0_i32_0 = arith.constant 0 : i32
    %c0_i32_1 = arith.constant 0 : i32
    return %2, %c0_i32_0 : i32, i32
  }
  func.func @transform_1(%arg0: i32, %arg1: i32) -> (i32, i32) {
    %c1_i32 = arith.constant 1 : i32
    %0 = arith.muli %arg0, %c1_i32 : i32
    %1 = arith.addi %0, %arg1 : i32
    %c0_i32 = arith.constant 0 : i32
    %2 = arith.minsi %1, %c0_i32 : i32
    %c0_i32_0 = arith.constant 0 : i32
    %c0_i32_1 = arith.constant 0 : i32
    return %2, %c0_i32_0 : i32, i32
  }
  func.func @transform_2(%arg0: i32, %arg1: i32) -> (i32, i32) {
    %c1_i32 = arith.constant 1 : i32
    %0 = arith.muli %arg0, %c1_i32 : i32
    %1 = arith.addi %0, %arg1 : i32
    %c0_i32 = arith.constant 0 : i32
    %2 = arith.minsi %1, %c0_i32 : i32
    %c0_i32_0 = arith.constant 0 : i32
    %c0_i32_1 = arith.constant 0 : i32
    return %2, %c0_i32_0 : i32, i32
  }
  func.func @transform_3(%arg0: i32, %arg1: i32) -> (i32, i32) {
    %c0_i32 = arith.constant 0 : i32
    %c0_i32_0 = arith.constant 0 : i32
    return %arg0, %c0_i32 : i32, i32
  }
}

</mosaic_0001>

<llo_original>
// kernel: tpu_custom_call.1
$region0: #{tpu_custom_call.1}
  #allocation0 [shape = 'u32[]', space=smem, size = 0x4, offset = 0x4, fixed_abs, tag = 'smem constant byte address 0x4 - core index']
  #allocation1 [shape = 'u32[144,128]{1,0:T(1,128)}', space=vmem, size = 0x12000, scoped, tag = 'internal scratch']
  #allocation2 [shape = 'f32[8,128]{1,0:T(8,128)}', space=vmem, size = 0x1000, scoped, tag = 'scratch operand']
  %s0 = inlined_call_operand.hbm [shape: f32[16,128], index: 0, kind: input, shape index: {}]
  %s1 = inlined_call_operand.hbm [shape: f32[16,128], index: 1, kind: input, shape index: {}]
  %s2 = inlined_call_operand.hbm [shape: f32[16,128], index: 2, kind: input, shape index: {}]
  %s3 = inlined_call_operand.hbm [shape: f32[1,1], index: 3, kind: output, shape index: {}]
  %s4 = sld [smem:[#allocation0]]
  $region42: #{tpu_custom_call.1} parent=0
    _
  %s6 = ssub.s32 1, %s4
  %s7 = scalar_select 0, %s6, %s4
  $region1: #{tpu_custom_call.1} parent=0
    #allocation3 [shape = 'u8[8192]{0}', space=vmem, size = 0x2000, scoped, tag = 'input window, operand 0, single buffered']
    #allocation4 [shape = 's32[1]{0}', space=sflag, size = 0x4, scoped, tag = 'scoped memory for tpu_custom_call.1']
    #allocation5 [shape = 's32[1]{0}', space=sflag, size = 0x4, scoped, tag = 'scoped memory for tpu_custom_call.1']
    #allocation6 [shape = 'u8[8192]{0}', space=vmem, size = 0x2000, scoped, tag = 'input window, operand 1, single buffered']
    #allocation7 [shape = 's32[1]{0}', space=sflag, size = 0x4, scoped, tag = 'scoped memory for tpu_custom_call.1']
    #allocation8 [shape = 'u8[8192]{0}', space=vmem, size = 0x2000, scoped, tag = 'input window, operand 2, single buffered']
    #allocation9 [shape = 'u8[512]{0}', space=smem, size = 0x200, scoped, tag = 'output window, operand 0, single buffered']
    %8 = vsyncpa [#allocation4], 0
    %9 = vsyncpa [#allocation7], 0
    %10 = vsyncpa [#allocation5], 0
    // Predicated region
    $region2: #{tpu_custom_call.1} parent=1 // pred_check
      _
    $region3: #{tpu_custom_call.1} parent=1 // pred_check_branch
      %12 = sbr.rel (0) target = $region5
    $region4: #{tpu_custom_call.1} parent=1 // pred_region
      %s13 = sadd.s32 0, 0
      %p14 = scmp.lt.s32.totalorder %s13, 0
      %s15 = scalar_select %p14, %s13, 0
      %s16 = smul.u32 2, %s15
      %s18 = ssub.s32 256, 256
      %19 = vsyncadd [#allocation4], %s18
      %s20 = smul.addr %s16, 128
      %s21 = scalar_lea.hbm %s0, %s20
      %s22 = sshll.u32 [#allocation3], 4
      %s23 = int_to_ptr.vmem [resolvable:$true] %s22
      %28 = dma.hbm_to_vmem [thread:$0]  %s21, 256, %s23, [#allocation4], 128, 128, 8
    $region5: #{tpu_custom_call.1} parent=1 // pred_fallthru
      _
    // Predicated region
    $region6: #{tpu_custom_call.1} parent=1 // pred_check
      _
    $region7: #{tpu_custom_call.1} parent=1 // pred_check_branch
      %30 = sbr.rel (0) target = $region9
    $region8: #{tpu_custom_call.1} parent=1 // pred_region
      %s31 = sadd.s32 0, 0
      %p32 = scmp.lt.s32.totalorder %s31, 0
      %s33 = scalar_select %p32, %s31, 0
      %s34 = smul.u32 2, %s33
      %s36 = ssub.s32 256, 256
      %37 = vsyncadd [#allocation7], %s36
      %s38 = smul.addr %s34, 128
      %s39 = scalar_lea.hbm %s1, %s38
      %s40 = sshll.u32 [#allocation6], 4
      %s41 = int_to_ptr.vmem [resolvable:$true] %s40
      %46 = dma.hbm_to_vmem [thread:$0]  %s39, 256, %s41, [#allocation7], 128, 128, 8
    $region9: #{tpu_custom_call.1} parent=1 // pred_fallthru
      _
    // Predicated region
    $region10: #{tpu_custom_call.1} parent=1 // pred_check
      _
    $region11: #{tpu_custom_call.1} parent=1 // pred_check_branch
      %48 = sbr.rel (0) target = $region13
    $region12: #{tpu_custom_call.1} parent=1 // pred_region
      %s49 = sadd.s32 0, 0
      %p50 = scmp.lt.s32.totalorder %s49, 0
      %s51 = scalar_select %p50, %s49, 0
      %s52 = smul.u32 2, %s51
      %s54 = ssub.s32 256, 256
      %55 = vsyncadd [#allocation7], %s54
      %s56 = smul.addr %s52, 128
      %s57 = scalar_lea.hbm %s2, %s56
      %s58 = sshll.u32 [#allocation8], 4
      %s59 = int_to_ptr.vmem [resolvable:$true] %s58
      %64 = dma.hbm_to_vmem [thread:$0]  %s57, 256, %s59, [#allocation7], 128, 128, 8
    $region13: #{tpu_custom_call.1} parent=1 // pred_fallthru
      _
    // Predicated region
    $region14: #{tpu_custom_call.1} parent=1 // pred_check
      _
    $region15: #{tpu_custom_call.1} parent=1 // pred_check_branch
      %66 = sbr.rel (0) target = $region17
    $region16: #{tpu_custom_call.1} parent=1 // pred_region
      %67 = dma.done [#allocation4], 256
    $region17: #{tpu_custom_call.1} parent=1 // pred_fallthru
      _
    // Predicated region
    $region18: #{tpu_custom_call.1} parent=1 // pred_check
      _
    $region19: #{tpu_custom_call.1} parent=1 // pred_check_branch
      %69 = sbr.rel (0) target = $region21
    $region20: #{tpu_custom_call.1} parent=1 // pred_region
      %70 = dma.done [#allocation7], 256
    $region21: #{tpu_custom_call.1} parent=1 // pred_fallthru
      _
    // Predicated region
    $region22: #{tpu_custom_call.1} parent=1 // pred_check
      _
    $region23: #{tpu_custom_call.1} parent=1 // pred_check_branch
      %72 = sbr.rel (0) target = $region25
    $region24: #{tpu_custom_call.1} parent=1 // pred_region
      %73 = dma.done [#allocation7], 256
    $region25: #{tpu_custom_call.1} parent=1 // pred_fallthru
      _
    %s74 = sadd.s32 0, 0
    %p75 = scmp.lt.s32.totalorder %s74, 0
    %s76 = scalar_select %p75, %s74, 0
    %s77 = smul.u32 2, %s76
    %s78 = sadd.s32 0, 0
    %p79 = scmp.lt.s32.totalorder %s78, 0
    %s80 = scalar_select %p79, %s78, 0
    %s81 = smul.u32 2, %s80
    %s82 = sadd.s32 0, 0
    %p83 = scmp.lt.s32.totalorder %s82, 0
    %s84 = scalar_select %p83, %s82, 0
    %s85 = smul.u32 2, %s84
    %p86 = scmp.eq.s32.totalorder 0, 0
    // Predicated region
    $region26: #{tpu_custom_call.1} parent=1 // pred_check
      %p87 = pneg %p86
    $region27: #{tpu_custom_call.1} parent=1 // pred_check_branch
      %89 = sbr.rel (%p87) target = $region29
    $region28: #{tpu_custom_call.1} parent=1 // pred_region
      %90 = vst [vmem:[#allocation2] sm:$0xff] 0.0
    $region29: #{tpu_custom_call.1} parent=1 // pred_fallthru
      _
    %v91 = vld [vmem:[#allocation3] sm:$0xff]
    %v92 = vld [vmem:[#allocation3 + $0x8] sm:$0xff]
    %v93 = vld [vmem:[#allocation6] sm:$0xff]
    %v94 = vld [vmem:[#allocation6 + $0x8] sm:$0xff]
    %v95 = vld [vmem:[#allocation8] sm:$0xff]
    %v96 = vld [vmem:[#allocation8 + $0x8] sm:$0xff]
    %v97 = vrcp.pop %v91
    %v98 = vmul.f32 %v93, %v97
    %v99 = vrcp.pop %v92
    %v100 = vmul.f32 %v94, %v99
    %v101 = vmax.f32 %v98, 0.8
    %v102 = vmax.f32 %v100, 0.8
    %v103 = vmin.f32 %v101, 1.2
    %v104 = vmin.f32 %v102, 1.2
    %v105 = vmul.f32 %v98, %v95
    %v106 = vmul.f32 %v100, %v96
    %v107 = vmin.f32 %v105, %v103
    %v108 = vmin.f32 %v106, %v104
    %v109 = vmul.f32 %v107, %v95
    %v110 = vmul.f32 %v108, %v96
    %v111 = vld [vmem:[#allocation2] sm:$0xff]
    %v112 = vadd.f32 %v109, %v110
    %v113 = vadd.f32 %v111, %v112
    %114 = vst [vmem:[#allocation2] sm:$0xff] %v113
    // Predicated region
    $region30: #{tpu_custom_call.1} parent=1 // pred_check
      %p115 = pneg %p86
    $region31: #{tpu_custom_call.1} parent=1 // pred_check_branch
      %117 = sbr.rel (%p115) target = $region33
    $region32: #{tpu_custom_call.1} parent=1 // pred_region
      %v118 = vld [vmem:[#allocation2] sm:$0xff]
      %119 = vadd.xlane.f32.xlu0 %v118
      %v120 = vpop.xlane.xlu0 %119
      %v121 = vrot.slane %v120, 4
      %v122 = vadd.f32 %v120, %v121
      %v123 = vrot.slane %v122, 2
      %v124 = vadd.f32 %v122, %v123
      %v125 = vrot.slane %v124, 1
      %v126 = vadd.f32 %v124, %v125
      %s127 = vtos %v126
      %s128 = scalar_lea.smem [#allocation9], 0
      %129 = sst [smem:[%s128]] %s127
    $region33: #{tpu_custom_call.1} parent=1 // pred_fallthru
      _
    // Predicated region
    $region34: #{tpu_custom_call.1} parent=1 // pred_check
      _
    $region35: #{tpu_custom_call.1} parent=1 // pred_check_branch
      %131 = sbr.rel (0) target = $region37
    $region36: #{tpu_custom_call.1} parent=1 // pred_region
      %s133 = ssub.s32 16, 16
      %134 = vsyncadd [#allocation5], %s133
      %137 = dma.smem_to_hbm [#allocation9], 16, %s3, [#allocation5]
    $region37: #{tpu_custom_call.1} parent=1 // pred_fallthru
      _
    // Predicated region
    $region38: #{tpu_custom_call.1} parent=1 // pred_check
      _
    $region39: #{tpu_custom_call.1} parent=1 // pred_check_branch
      %139 = sbr.rel (0) target = $region41
    $region40: #{tpu_custom_call.1} parent=1 // pred_region
      %140 = dma.done [#allocation5], 16
    $region41: #{tpu_custom_call.1} parent=1 // pred_fallthru
      _
    %141 = sfence
    %142 = vsyncpa [#allocation4], 1
    %143 = vsyncpa [#allocation7], 1
    %144 = vsyncpa [#allocation5], 1

</llo_original>
